<compile_context>
chip_gen: v5e
topology: v5e:2x2
jax: 0.10.0
libtpu: 0.0.40
codegen_flags: <defaults>
</compile_context>

<pallas_src>
import functools

import jax
import jax.numpy as jnp
from jax.experimental import pallas as pl
from jax.experimental.pallas import tpu as pltpu


def _round_up(n, m):
    return ((n + m - 1) // m) * m


def convblock_kernel(p_ref, w_ref, gamma_ref, beta_ref, mean_ref, var_ref, o_ref, *, eps):
    # p_ref:  (TM, KP)      bf16 im2col patch tile (lane-dense contraction dim)
    # w_ref:  (KP, CoutP)   bf16 flattened conv weights (resident across grid)
    # gamma/beta/mean/var: (1, CoutP) f32
    # o_ref:  (TM, CoutP)   f32 lane-dense output tile
    z = jnp.dot(p_ref[...], w_ref[...], preferred_element_type=jnp.float32)   # single MXU matmul
    # BatchNorm (eval) folded to per-channel scale/shift + ReLU, fused into the one store.
    scale = gamma_ref[...] * jax.lax.rsqrt(var_ref[...] + eps)                # (1, CoutP)
    shift = beta_ref[...] - mean_ref[...] * scale
    o_ref[...] = jnp.maximum(z * scale + shift, 0.0)


def conv_block(x, w, gamma, beta, running_mean, running_var, *,
               padding=1, eps=1e-5, compute_dtype=jnp.bfloat16, tm=256):
    """x: (B, Cin, H, W) f32 NCHW; w: (Cout, Cin, KH, KW) PyTorch OIHW (bias=False);
    gamma/beta/running_mean/running_var: (Cout,). Returns (B, Cout, Ho, Wo) f32."""
    B, Cin, H, W = x.shape
    Cout, _, KH, KW = w.shape
    Ho = H + 2 * padding - KH + 1          # stride = 1
    Wo = W + 2 * padding - KW + 1

    LANE = 128
    K = KH * KW * Cin
    KP = _round_up(max(K, LANE), LANE)          # lane-dense contraction dim
    CoutP = _round_up(max(Cout, LANE), LANE)    # lane-dense output dim

    M = B * Ho * Wo
    TM = min(tm, _round_up(M, 8))
    MP = _round_up(M, TM)                       # (8,128)-legal, unmasked stores

    # --- layout plumbing only (no compute hoisted into the wrapper) ---
    x_nhwc = jnp.transpose(x, (0, 2, 3, 1))                                   # (B, H, W, Cin)
    x_p = jnp.pad(x_nhwc, ((0, 0), (padding, padding), (padding, padding), (0, 0)))
    # im2col gather: taps ordered (kh, kw) with Cin innermost, matching the weight flatten.
    taps = [x_p[:, kh:kh + Ho, kw:kw + Wo, :] for kh in range(KH) for kw in range(KW)]
    patches = jnp.concatenate(taps, axis=-1).reshape(M, K)                    # (M, K)
    patches = jnp.pad(patches, ((0, MP - M), (0, KP - K))).astype(compute_dtype)

    w_flat = jnp.transpose(w, (2, 3, 1, 0)).reshape(K, Cout)                  # (KH*KW*Cin, Cout)
    w_p = jnp.pad(w_flat, ((0, KP - K), (0, CoutP - Cout))).astype(compute_dtype)

    def pad_vec(v, fill=0.0):
        return jnp.pad(v.astype(jnp.float32), (0, CoutP - Cout),
                       constant_values=fill).reshape(1, CoutP)

    gamma_p = pad_vec(gamma)
    beta_p = pad_vec(beta)
    mean_p = pad_vec(running_mean)
    var_p = pad_vec(running_var, fill=1.0)      # keep rsqrt benign on padded lanes

    n_tiles = MP // TM
    flops = 2 * MP * KP * CoutP
    bytes_accessed = (patches.size + w_p.size) * 2 + (4 * CoutP + MP * CoutP) * 4
    cost = pl.CostEstimate(flops=flops, transcendentals=CoutP, bytes_accessed=bytes_accessed)

    out_p = pl.pallas_call(
        functools.partial(convblock_kernel, eps=eps),
        out_shape=jax.ShapeDtypeStruct((MP, CoutP), jnp.float32),
        grid=(n_tiles,),
        in_specs=[
            pl.BlockSpec((TM, KP), lambda i: (i, 0)),        # streaming patch tiles
            pl.BlockSpec((KP, CoutP), lambda i: (0, 0)),     # resident weights
            pl.BlockSpec((1, CoutP), lambda i: (0, 0)),      # resident BN vectors
            pl.BlockSpec((1, CoutP), lambda i: (0, 0)),
            pl.BlockSpec((1, CoutP), lambda i: (0, 0)),
            pl.BlockSpec((1, CoutP), lambda i: (0, 0)),
        ],
        out_specs=pl.BlockSpec((TM, CoutP), lambda i: (i, 0)),
        compiler_params=pltpu.CompilerParams(dimension_semantics=("parallel",)),
        cost_estimate=cost,
    )(patches, w_p, gamma_p, beta_p, mean_p, var_p)

    out = out_p[:M].reshape(B, Ho, Wo, CoutP)[:, :, :, :Cout]
    return jnp.transpose(out, (0, 3, 1, 2))                                   # back to NCHW


def reference(x, w, gamma, beta, mean, var, *, padding=1, eps=1e-5):
    y = jax.lax.conv_general_dilated(
        x, w, window_strides=(1, 1),
        padding=[(padding, padding), (padding, padding)],
        dimension_numbers=("NCHW", "OIHW", "NCHW"))
    scale = gamma * jax.lax.rsqrt(var + eps)
    shift = beta - mean * scale
    y = y * scale[None, :, None, None] + shift[None, :, None, None]
    return jnp.maximum(y, 0.0)


if __name__ == "__main__":
    key = jax.random.PRNGKey(0)
    kx, kw, kg, kb, km, kv = jax.random.split(key, 6)

    B, Cin, H, W = 2, 4, 16, 16
    Cout, KH, KW = 8, 3, 3

    x = jax.random.normal(kx, (B, Cin, H, W), jnp.float32)
    w = jax.random.normal(kw, (Cout, Cin, KH, KW), jnp.float32) * 0.1
    gamma = jax.random.uniform(kg, (Cout,), jnp.float32, 0.5, 1.5)
    beta = jax.random.normal(kb, (Cout,), jnp.float32) * 0.1
    running_mean = jax.random.normal(km, (Cout,), jnp.float32) * 0.1
    running_var = jax.random.uniform(kv, (Cout,), jnp.float32, 0.5, 1.5)

    out = conv_block(x, w, gamma, beta, running_mean, running_var)
    out = jax.block_until_ready(out)

    ref = reference(x, w, gamma, beta, running_mean, running_var)
    assert out.shape == (B, Cout, H, W), out.shape
    # bf16 operands with f32 accumulation -> compare at bf16-appropriate tolerance.
    assert jnp.allclose(out, ref, atol=2e-2, rtol=2e-2), float(jnp.max(jnp.abs(out - ref)))

    print("KERNEL_OK")
</pallas_src>

<mosaic_0001>
module attributes {stable_mosaic.version = 11 : i64} {
  func.func @convblock_kernel(%arg0: i32, %arg1: memref<256x128xbf16, #tpu.memory_space<vmem>>, %arg2: memref<128x128xbf16, #tpu.memory_space<vmem>>, %arg3: memref<1x128xf32, #tpu.memory_space<vmem>>, %arg4: memref<1x128xf32, #tpu.memory_space<vmem>>, %arg5: memref<1x128xf32, #tpu.memory_space<vmem>>, %arg6: memref<1x128xf32, #tpu.memory_space<vmem>>, %arg7: memref<256x128xf32, #tpu.memory_space<vmem>>) attributes {dimension_semantics = [#tpu.dimension_semantics<parallel>], iteration_bounds = array<i64: 2>, scalar_prefetch = 0 : i64, scratch_operands = 0 : i64, tpu.core_type = #tpu.core_type<tc>, window_params = [{transform_indices = @transform_0, window_bounds = array<i64: 256, 128>}, {pipeline_mode = #tpu.pipeline_mode<synchronous>, transform_indices = @transform_1, window_bounds = array<i64: 128, 128>}, {pipeline_mode = #tpu.pipeline_mode<synchronous>, transform_indices = @transform_2, window_bounds = array<i64: 1, 128>}, {pipeline_mode = #tpu.pipeline_mode<synchronous>, transform_indices = @transform_3, window_bounds = array<i64: 1, 128>}, {pipeline_mode = #tpu.pipeline_mode<synchronous>, transform_indices = @transform_4, window_bounds = array<i64: 1, 128>}, {pipeline_mode = #tpu.pipeline_mode<synchronous>, transform_indices = @transform_5, window_bounds = array<i64: 1, 128>}, {transform_indices = @transform_6, window_bounds = array<i64: 256, 128>}]} {
    %c0 = arith.constant 0 : index
    %c0_0 = arith.constant 0 : index
    %0 = vector.load %arg1[%c0, %c0_0] : memref<256x128xbf16, #tpu.memory_space<vmem>>, vector<256x128xbf16>
    %c0_1 = arith.constant 0 : index
    %c0_2 = arith.constant 0 : index
    %1 = vector.load %arg2[%c0_1, %c0_2] : memref<128x128xbf16, #tpu.memory_space<vmem>>, vector<128x128xbf16>
    %cst = arith.constant dense<0.000000e+00> : vector<256x128xf32>
    %2 = tpu.matmul %0, %1, %cst {dimension_numbers = #tpu.dot_dimension_numbers<[1], [0], [0], [1], [0, 0, 1, 1], [], []>} : vector<256x128xbf16>, vector<128x128xbf16>, vector<256x128xf32> -> vector<256x128xf32>
    %c0_3 = arith.constant 0 : index
    %c0_4 = arith.constant 0 : index
    %3 = vector.load %arg3[%c0_3, %c0_4] : memref<1x128xf32, #tpu.memory_space<vmem>>, vector<1x128xf32>
    %c0_5 = arith.constant 0 : index
    %c0_6 = arith.constant 0 : index
    %4 = vector.load %arg6[%c0_5, %c0_6] : memref<1x128xf32, #tpu.memory_space<vmem>>, vector<1x128xf32>
    %cst_7 = arith.constant 9.99999974E-6 : f32
    %5 = vector.broadcast %cst_7 : f32 to vector<1x128xf32>
    %6 = arith.addf %4, %5 : vector<1x128xf32>
    %7 = math.rsqrt %6 : vector<1x128xf32>
    %8 = arith.mulf %3, %7 : vector<1x128xf32>
    %c0_8 = arith.constant 0 : index
    %c0_9 = arith.constant 0 : index
    %9 = vector.load %arg4[%c0_8, %c0_9] : memref<1x128xf32, #tpu.memory_space<vmem>>, vector<1x128xf32>
    %c0_10 = arith.constant 0 : index
    %c0_11 = arith.constant 0 : index
    %10 = vector.load %arg5[%c0_10, %c0_11] : memref<1x128xf32, #tpu.memory_space<vmem>>, vector<1x128xf32>
    %11 = arith.mulf %10, %8 : vector<1x128xf32>
    %12 = arith.subf %9, %11 : vector<1x128xf32>
    %13 = vector.broadcast %8 : vector<1x128xf32> to vector<256x128xf32>
    %14 = arith.mulf %2, %13 : vector<256x128xf32>
    %15 = vector.broadcast %12 : vector<1x128xf32> to vector<256x128xf32>
    %16 = arith.addf %14, %15 : vector<256x128xf32>
    %cst_12 = arith.constant 0.000000e+00 : f32
    %17 = vector.broadcast %cst_12 : f32 to vector<256x128xf32>
    %18 = arith.maximumf %16, %17 : vector<256x128xf32>
    %c0_13 = arith.constant 0 : index
    %c0_14 = arith.constant 0 : index
    %19 = vector.load %arg7[%c0_13, %c0_14] : memref<256x128xf32, #tpu.memory_space<vmem>>, vector<256x128xf32>
    tpu.vector_store %arg7[%c0_13, %c0_14], %18 {strides = array<i32>} : memref<256x128xf32, #tpu.memory_space<vmem>>, vector<256x128xf32>,
    return
  }
  func.func @transform_0(%arg0: i32) -> (i32, i32) {
    %c0_i32 = arith.constant 0 : i32
    %c0_i32_0 = arith.constant 0 : i32
    return %arg0, %c0_i32 : i32, i32
  }
  func.func @transform_1(%arg0: i32) -> (i32, i32) {
    %c0_i32 = arith.constant 0 : i32
    %c0_i32_0 = arith.constant 0 : i32
    %c0_i32_1 = arith.constant 0 : i32
    return %c0_i32, %c0_i32_0 : i32, i32
  }
  func.func @transform_2(%arg0: i32) -> (i32, i32) {
    %c0_i32 = arith.constant 0 : i32
    %c0_i32_0 = arith.constant 0 : i32
    %c0_i32_1 = arith.constant 0 : i32
    return %c0_i32, %c0_i32_0 : i32, i32
  }
  func.func @transform_3(%arg0: i32) -> (i32, i32) {
    %c0_i32 = arith.constant 0 : i32
    %c0_i32_0 = arith.constant 0 : i32
    %c0_i32_1 = arith.constant 0 : i32
    return %c0_i32, %c0_i32_0 : i32, i32
  }
  func.func @transform_4(%arg0: i32) -> (i32, i32) {
    %c0_i32 = arith.constant 0 : i32
    %c0_i32_0 = arith.constant 0 : i32
    %c0_i32_1 = arith.constant 0 : i32
    return %c0_i32, %c0_i32_0 : i32, i32
  }
  func.func @transform_5(%arg0: i32) -> (i32, i32) {
    %c0_i32 = arith.constant 0 : i32
    %c0_i32_0 = arith.constant 0 : i32
    %c0_i32_1 = arith.constant 0 : i32
    return %c0_i32, %c0_i32_0 : i32, i32
  }
  func.func @transform_6(%arg0: i32) -> (i32, i32) {
    %c0_i32 = arith.constant 0 : i32
    %c0_i32_0 = arith.constant 0 : i32
    return %arg0, %c0_i32 : i32, i32
  }
}

</mosaic_0001>

<llo_original>
// kernel: tpu_custom_call.1
$region0: #{tpu_custom_call.1}
  #allocation0 [shape = 'u32[]', space=smem, size = 0x4, offset = 0x4, fixed_abs, tag = 'smem constant byte address 0x4 - core index']
  #allocation1 [shape = 'u32[72,128]{1,0:T(1,128)}', space=vmem, size = 0x9000, scoped, tag = 'internal scratch']
  %s0 = inlined_call_operand.hbm [shape: bf16[512,128], index: 0, kind: input, shape index: {}]
  %s1 = inlined_call_operand.hbm [shape: bf16[128,128], index: 1, kind: input, shape index: {}]
  %s2 = inlined_call_operand.vmem [shape: f32[1,128], index: 2, kind: input, shape index: {}]
  %s3 = inlined_call_operand.vmem [shape: f32[1,128], index: 3, kind: input, shape index: {}]
  %s4 = inlined_call_operand.vmem [shape: f32[1,128], index: 4, kind: input, shape index: {}]
  %s5 = inlined_call_operand.vmem [shape: f32[1,128], index: 5, kind: input, shape index: {}]
  %s6 = inlined_call_operand.hbm [shape: f32[512,128], index: 6, kind: output, shape index: {}]
  %s7 = sld [smem:[#allocation0]]
  $region65: #{tpu_custom_call.1} parent=0
    _
  %s9 = ssub.s32 1, %s7
  %s10 = scalar_select 0, %s9, %s7
  $region1: #{tpu_custom_call.1} parent=0
    #allocation2 [shape = 'u8[131072]{0}', space=vmem, size = 0x20000, scoped, tag = 'input window, operand 0']
    #allocation3 [shape = 's32[2]{0}', space=sflag, size = 0x8, scoped, tag = 'scoped memory for tpu_custom_call.1']
    #allocation4 [shape = 's32[2]{0}', space=sflag, size = 0x8, scoped, tag = 'scoped memory for tpu_custom_call.1']
    #allocation5 [shape = 'u8[32768]{0}', space=vmem, size = 0x8000, scoped, tag = 'input window, operand 1, single buffered']
    #allocation6 [shape = 's32[1]{0}', space=sflag, size = 0x4, scoped, tag = 'scoped memory for tpu_custom_call.1']
    #allocation7 [shape = 'u8[262144]{0}', space=vmem, size = 0x40000, scoped, tag = 'output window, operand 0']
    %11 = vsyncpa [#allocation3], 0
    %s12 = scalar_lea.sflag [#allocation3], 1
    %13 = vsyncpa %s12, 0
    %14 = vsyncpa [#allocation6], 0
    %15 = vsyncpa [#allocation4], 0
    %s16 = scalar_lea.sflag [#allocation4], 1
    %17 = vsyncpa %s16, 0
    loop: start=0, step=1, limit=4
    $region2: #{tpu_custom_call.1} parent=1 // loop_pre_header
      _
    $region3: #{tpu_custom_call.1} parent=1 // loop_header
      %s19 = sphi 0, %s23
      %p20 = scmp.ge.s32.totalorder %s19, 4
      %s29 = sphi 0, %s31
      %s32 = sphi 0, %s29
      %s33 = sphi 0, %s32
      %s49 = sphi 0, %s33
      %s53 = sphi 0, %s53
      %s55 = sphi 0, %s53
      %s56 = sphi 0, %s55
      %s70 = sphi 0, %s56
      %s74 = sphi 0, %s74
      %s76 = sphi 0, %s74
      %s77 = sphi 0, %s76
      %s91 = sphi 0, %s77
      %s95 = sphi 0, %s95
      %s97 = sphi 0, %s95
      %s98 = sphi 0, %s97
      %s112 = sphi 0, %s98
      %s116 = sphi 0, %s116
      %s118 = sphi 0, %s116
      %s119 = sphi 0, %s118
      %s133 = sphi 0, %s119
      %s137 = sphi 0, %s137
      %s139 = sphi 0, %s137
      %s140 = sphi 0, %s139
      %s154 = sphi 0, %s140
      %s160 = sphi 0, %s162
      %s163 = sphi 0, %s160
      %s164 = sphi 0, %s163
      %s180 = sphi 0, %s164
    $region4: #{tpu_custom_call.1} parent=1 // loop_header_branch
      %22 = sbr.rel (%p20) target = $region8
    $region5: #{tpu_custom_call.1} parent=1 // loop_body
      %s24 = ssub.s32 %s19, 1
      %s25 = ssub.s32 %s19, 2
      %s26 = sadd.s32 %s19, 1
      %s27 = ssub.s32 %s19, %s26
      %p28 = scmp.eq.s32.totalorder %s27, 0
      %s30 = sadd.s32 %s29, 1
      %s31 = scalar_select %p28, %s29, %s30
      %p34 = pneg %p28
      %p35 = scmp.eq.s32.totalorder %s19, 1
      %p36 = por %p34, %p35
      %p37 = scmp.ne.s32.totalorder %s29, %s32
      %p38 = scmp.eq.s32.totalorder %s19, 0
      %p39 = por %p37, %p38
      %p40 = scmp.ne.s32.totalorder %s29, %s32
      %p41 = scmp.eq.s32.totalorder %s24, 1
      %p42 = por %p40, %p41
      %p43 = scmp.ne.s32.totalorder %s32, %s33
      %p44 = scmp.eq.s32.totalorder %s24, 0
      %p45 = por %p43, %p44
      %p46 = scmp.ne.s32.totalorder %s32, %s33
      %p47 = scmp.eq.s32.totalorder %s25, 1
      %p48 = por %p46, %p47
      %p50 = scmp.ne.s32.totalorder %s33, %s49
      %p51 = scmp.eq.s32.totalorder %s25, 0
      %p52 = por %p50, %p51
      %s54 = sadd.s32 %s53, 1
      %p57 = scmp.eq.s32.totalorder %s19, 1
      %p58 = scmp.ne.s32.totalorder %s53, %s55
      %p59 = scmp.eq.s32.totalorder %s19, 0
      %p60 = por %p58, %p59
      %p61 = scmp.ne.s32.totalorder %s53, %s55
      %p62 = scmp.eq.s32.totalorder %s24, 1
      %p63 = por %p61, %p62
      %p64 = scmp.ne.s32.totalorder %s55, %s56
      %p65 = scmp.eq.s32.totalorder %s24, 0
      %p66 = por %p64, %p65
      %p67 = scmp.ne.s32.totalorder %s55, %s56
      %p68 = scmp.eq.s32.totalorder %s25, 1
      %p69 = por %p67, %p68
      %p71 = scmp.ne.s32.totalorder %s56, %s70
      %p72 = scmp.eq.s32.totalorder %s25, 0
      %p73 = por %p71, %p72
      %s75 = sadd.s32 %s74, 1
      %p78 = scmp.eq.s32.totalorder %s19, 1
      %p79 = scmp.ne.s32.totalorder %s74, %s76
      %p80 = scmp.eq.s32.totalorder %s19, 0
      %p81 = por %p79, %p80
      %p82 = scmp.ne.s32.totalorder %s74, %s76
      %p83 = scmp.eq.s32.totalorder %s24, 1
      %p84 = por %p82, %p83
      %p85 = scmp.ne.s32.totalorder %s76, %s77
      %p86 = scmp.eq.s32.totalorder %s24, 0
      %p87 = por %p85, %p86
      %p88 = scmp.ne.s32.totalorder %s76, %s77
      %p89 = scmp.eq.s32.totalorder %s25, 1
      %p90 = por %p88, %p89
      %p92 = scmp.ne.s32.totalorder %s77, %s91
      %p93 = scmp.eq.s32.totalorder %s25, 0
      %p94 = por %p92, %p93
      %s96 = sadd.s32 %s95, 1
      %p99 = scmp.eq.s32.totalorder %s19, 1
      %p100 = scmp.ne.s32.totalorder %s95, %s97
      %p101 = scmp.eq.s32.totalorder %s19, 0
      %p102 = por %p100, %p101
      %p103 = scmp.ne.s32.totalorder %s95, %s97
      %p104 = scmp.eq.s32.totalorder %s24, 1
      %p105 = por %p103, %p104
      %p106 = scmp.ne.s32.totalorder %s97, %s98
      %p107 = scmp.eq.s32.totalorder %s24, 0
      %p108 = por %p106, %p107
      %p109 = scmp.ne.s32.totalorder %s97, %s98
      %p110 = scmp.eq.s32.totalorder %s25, 1
      %p111 = por %p109, %p110
      %p113 = scmp.ne.s32.totalorder %s98, %s112
      %p114 = scmp.eq.s32.totalorder %s25, 0
      %p115 = por %p113, %p114
      %s117 = sadd.s32 %s116, 1
      %p120 = scmp.eq.s32.totalorder %s19, 1
      %p121 = scmp.ne.s32.totalorder %s116, %s118
      %p122 = scmp.eq.s32.totalorder %s19, 0
      %p123 = por %p121, %p122
      %p124 = scmp.ne.s32.totalorder %s116, %s118
      %p125 = scmp.eq.s32.totalorder %s24, 1
      %p126 = por %p124, %p125
      %p127 = scmp.ne.s32.totalorder %s118, %s119
      %p128 = scmp.eq.s32.totalorder %s24, 0
      %p129 = por %p127, %p128
      %p130 = scmp.ne.s32.totalorder %s118, %s119
      %p131 = scmp.eq.s32.totalorder %s25, 1
      %p132 = por %p130, %p131
      %p134 = scmp.ne.s32.totalorder %s119, %s133
      %p135 = scmp.eq.s32.totalorder %s25, 0
      %p136 = por %p134, %p135
      %s138 = sadd.s32 %s137, 1
      %p141 = scmp.eq.s32.totalorder %s19, 1
      %p142 = scmp.ne.s32.totalorder %s137, %s139
      %p143 = scmp.eq.s32.totalorder %s19, 0
      %p144 = por %p142, %p143
      %p145 = scmp.ne.s32.totalorder %s137, %s139
      %p146 = scmp.eq.s32.totalorder %s24, 1
      %p147 = por %p145, %p146
      %p148 = scmp.ne.s32.totalorder %s139, %s140
      %p149 = scmp.eq.s32.totalorder %s24, 0
      %p150 = por %p148, %p149
      %p151 = scmp.ne.s32.totalorder %s139, %s140
      %p152 = scmp.eq.s32.totalorder %s25, 1
      %p153 = por %p151, %p152
      %p155 = scmp.ne.s32.totalorder %s140, %s154
      %p156 = scmp.eq.s32.totalorder %s25, 0
      %p157 = por %p155, %p156
      %s158 = ssub.s32 %s19, %s26
      %p159 = scmp.eq.s32.totalorder %s158, 0
      %s161 = sadd.s32 %s160, 1
      %s162 = scalar_select %p159, %s160, %s161
      %p165 = pneg %p159
      %p166 = scmp.eq.s32.totalorder %s19, 1
      %p167 = por %p165, %p166
      %p168 = scmp.ne.s32.totalorder %s160, %s163
      %p169 = scmp.eq.s32.totalorder %s19, 0
      %p170 = por %p168, %p169
      %p171 = scmp.ne.s32.totalorder %s160, %s163
      %p172 = scmp.eq.s32.totalorder %s24, 1
      %p173 = por %p171, %p172
      %p174 = scmp.ne.s32.totalorder %s163, %s164
      %p175 = scmp.eq.s32.totalorder %s24, 0
      %p176 = por %p174, %p175
      %p177 = scmp.ne.s32.totalorder %s163, %s164
      %p178 = scmp.eq.s32.totalorder %s25, 1
      %p179 = por %p177, %p178
      %p181 = scmp.ne.s32.totalorder %s164, %s180
      %p182 = scmp.eq.s32.totalorder %s25, 0
      %p183 = por %p181, %p182
      %p184 = scmp.le.s32.totalorder 1, %s19
      %p185 = scmp.lt.s32.totalorder %s19, 3
      %p186 = pnand %p184, %p185
      %p187 = pneg %p186
      // Predicated region
      $region9: #{tpu_custom_call.1} parent=5 // pred_check
        _
      $region10: #{tpu_custom_call.1} parent=5 // pred_check_branch
        %189 = sbr.rel (%p186) target = $region12
      $region11: #{tpu_custom_call.1} parent=5 // pred_region
        %s190 = ssub.s32 %s19, 1
        // Predicated region
        $region13: #{tpu_custom_call.1} parent=11 // pred_check
          %p191 = pneg %p66
        $region14: #{tpu_custom_call.1} parent=11 // pred_check_branch
          %193 = sbr.rel (%p191) target = $region16
        $region15: #{tpu_custom_call.1} parent=11 // pred_region
          %195 = vsyncadd [#allocation6], 0
          %s196 = sshll.u32 %s1, 4
          %s197 = int_to_ptr.hbm [resolvable:$true] %s196
          %s198 = sshll.u32 [#allocation5], 4
          %s199 = int_to_ptr.vmem [resolvable:$true] %s198
          %204 = dma.hbm_to_vmem [thread:$0]  %s197, 1024, %s199, [#allocation6], 64, 64, 4
        $region16: #{tpu_custom_call.1} parent=11 // pred_fallthru
          _
        // Predicated region
        $region17: #{tpu_custom_call.1} parent=11 // pred_check
          %p205 = pneg %p87
        $region18: #{tpu_custom_call.1} parent=11 // pred_check_branch
          %207 = sbr.rel (%p205) target = $region20
        $region19: #{tpu_custom_call.1} parent=11 // pred_region
          _
        $region20: #{tpu_custom_call.1} parent=11 // pred_fallthru
          _
        // Predicated region
        $region21: #{tpu_custom_call.1} parent=11 // pred_check
          %p208 = pneg %p108
        $region22: #{tpu_custom_call.1} parent=11 // pred_check_branch
          %210 = sbr.rel (%p208) target = $region24
        $region23: #{tpu_custom_call.1} parent=11 // pred_region
          _
        $region24: #{tpu_custom_call.1} parent=11 // pred_fallthru
          _
        // Predicated region
        $region25: #{tpu_custom_call.1} parent=11 // pred_check
          %p211 = pneg %p129
        $region26: #{tpu_custom_call.1} parent=11 // pred_check_branch
          %213 = sbr.rel (%p211) target = $region28
        $region27: #{tpu_custom_call.1} parent=11 // pred_region
          _
        $region28: #{tpu_custom_call.1} parent=11 // pred_fallthru
          _
        // Predicated region
        $region29: #{tpu_custom_call.1} parent=11 // pred_check
          %p214 = pneg %p150
        $region30: #{tpu_custom_call.1} parent=11 // pred_check_branch
          %216 = sbr.rel (%p214) target = $region32
        $region31: #{tpu_custom_call.1} parent=11 // pred_region
          _
        $region32: #{tpu_custom_call.1} parent=11 // pred_fallthru
          _
      $region12: #{tpu_custom_call.1} parent=5 // pred_fallthru
        _
      %p217 = scmp.lt.s32.totalorder %s19, 2
      // Predicated region
      $region33: #{tpu_custom_call.1} parent=5 // pred_check
        %p218 = pneg %p217
      $region34: #{tpu_custom_call.1} parent=5 // pred_check_branch
        %220 = sbr.rel (%p218) target = $region36
      $region35: #{tpu_custom_call.1} parent=5 // pred_region
        // Predicated region
        $region37: #{tpu_custom_call.1} parent=35 // pred_check
          %p221 = pneg %p39
        $region38: #{tpu_custom_call.1} parent=35 // pred_check_branch
          %223 = sbr.rel (%p221) target = $region40
        $region39: #{tpu_custom_call.1} parent=35 // pred_region
          %s224 = sand.u32 %s29, 1
          %s225 = scalar_lea.sflag [#allocation3], %s224
          %s226 = sand.u32 %s29, 1
          %s227 = smul.addr %s226, 128
          %s228 = scalar_lea.vmem [#allocation2], %s227
          %s229 = smul.u32 32, %s19
          %231 = vsyncadd %s225, 0
          %s232 = smul.addr %s229, 4
          %s233 = scalar_lea.hbm %s0, %s232
          %s234 = sshll.u32 %s233, 4
          %s235 = int_to_ptr.hbm [resolvable:$true] %s234
          %s236 = sshll.u32 %s228, 4
          %s237 = int_to_ptr.vmem [resolvable:$true] %s236
          %242 = dma.hbm_to_vmem [thread:$0]  %s235, 2048, %s237, %s225, 64, 64, 4
        $region40: #{tpu_custom_call.1} parent=35 // pred_fallthru
          _
      $region36: #{tpu_custom_call.1} parent=5 // pred_fallthru
        _
      %p243 = scmp.le.s32.totalorder 1, %s19
      %p244 = scmp.lt.s32.totalorder %s19, 3
      %p245 = pnand %p243, %p244
      %p246 = pneg %p245
      // Predicated region
      $region41: #{tpu_custom_call.1} parent=5 // pred_check
        _
      $region42: #{tpu_custom_call.1} parent=5 // pred_check_branch
        %248 = sbr.rel (%p245) target = $region44
      $region43: #{tpu_custom_call.1} parent=5 // pred_region
        %s249 = ssub.s32 %s19, 1
        %s250 = sand.u32 %s32, 1
        %s251 = scalar_lea.sflag [#allocation3], %s250
        %s252 = sand.u32 %s32, 1
        %s253 = smul.addr %s252, 128
        %s254 = scalar_lea.vmem [#allocation2], %s253
        // Predicated region
        $region45: #{tpu_custom_call.1} parent=43 // pred_check
          %p255 = pneg %p45
        $region46: #{tpu_custom_call.1} parent=43 // pred_check_branch
          %257 = sbr.rel (%p255) target = $region48
        $region47: #{tpu_custom_call.1} parent=43 // pred_region
          %259 = dma.done %s251, 2048
        $region48: #{tpu_custom_call.1} parent=43 // pred_fallthru
          _
        // Predicated region
        $region49: #{tpu_custom_call.1} parent=43 // pred_check
          %p260 = pneg %p66
        $region50: #{tpu_custom_call.1} parent=43 // pred_check_branch
          %262 = sbr.rel (%p260) target = $region52
        $region51: #{tpu_custom_call.1} parent=43 // pred_region
          %264 = dma.done [#allocation6], 1024
        $region52: #{tpu_custom_call.1} parent=43 // pred_fallthru
          _
        %s265 = sand.u32 %s32, 1
        %s266 = scalar_lea.sflag [#allocation3], %s265
        %s267 = sand.u32 %s32, 1
        %s268 = smul.addr %s267, 128
        %s269 = scalar_lea.vmem [#allocation2], %s268
        %p270 = pneg %p45
        %p271 = pneg %p42
        %p272 = pneg %p66
        %p273 = pneg %p63
        %p274 = pneg %p87
        %p275 = pneg %p84
        %p276 = pneg %p108
        %p277 = pneg %p105
        %p278 = pneg %p129
        %p279 = pneg %p126
        %p280 = pneg %p150
        %p281 = pneg %p147
        %p282 = pneg %p176
        %p283 = pneg %p173
        %s284 = sand.u32 %s163, 1
        %s285 = scalar_lea.sflag [#allocation4], %s284
        %s286 = sand.u32 %s163, 1
        %s287 = smul.addr %s286, 256
        %s288 = scalar_lea.vmem [#allocation7], %s287
        %s289 = smul.u32 32, %s24
        %s290 = smul.u32 32, %s24
        %v291 = vld [vmem:[%s254] sm:$0xf]
        %v292 = vld [vmem:[%s254 + $0x4] sm:$0xf]
        %v293 = vld [vmem:[%s254 + $0x8] sm:$0xf]
        %v294 = vld [vmem:[%s254 + $0xc] sm:$0xf]
        %v295 = vld [vmem:[%s254 + $0x10] sm:$0xf]
        %v296 = vld [vmem:[%s254 + $0x14] sm:$0xf]
        %v297 = vld [vmem:[%s254 + $0x18] sm:$0xf]
        %v298 = vld [vmem:[%s254 + $0x1c] sm:$0xf]
        %v299 = vld [vmem:[%s254 + $0x20] sm:$0xf]
        %v300 = vld [vmem:[%s254 + $0x24] sm:$0xf]
        %v301 = vld [vmem:[%s254 + $0x28] sm:$0xf]
        %v302 = vld [vmem:[%s254 + $0x2c] sm:$0xf]
        %v303 = vld [vmem:[%s254 + $0x30] sm:$0xf]
        %v304 = vld [vmem:[%s254 + $0x34] sm:$0xf]
        %v305 = vld [vmem:[%s254 + $0x38] sm:$0xf]
        %v306 = vld [vmem:[%s254 + $0x3c] sm:$0xf]
        %v307 = vld [vmem:[%s254 + $0x40] sm:$0xf]
        %v308 = vld [vmem:[%s254 + $0x44] sm:$0xf]
        %v309 = vld [vmem:[%s254 + $0x48] sm:$0xf]
        %v310 = vld [vmem:[%s254 + $0x4c] sm:$0xf]
        %v311 = vld [vmem:[%s254 + $0x50] sm:$0xf]
        %v312 = vld [vmem:[%s254 + $0x54] sm:$0xf]
        %v313 = vld [vmem:[%s254 + $0x58] sm:$0xf]
        %v314 = vld [vmem:[%s254 + $0x5c] sm:$0xf]
        %v315 = vld [vmem:[%s254 + $0x60] sm:$0xf]
        %v316 = vld [vmem:[%s254 + $0x64] sm:$0xf]
        %v317 = vld [vmem:[%s254 + $0x68] sm:$0xf]
        %v318 = vld [vmem:[%s254 + $0x6c] sm:$0xf]
        %v319 = vld [vmem:[%s254 + $0x70] sm:$0xf]
        %v320 = vld [vmem:[%s254 + $0x74] sm:$0xf]
        %v321 = vld [vmem:[%s254 + $0x78] sm:$0xf]
        %v322 = vld [vmem:[%s254 + $0x7c] sm:$0xf]
        %v323 = vld [vmem:[#allocation5] sm:$0xf]
        %v324 = vld [vmem:[#allocation5 + $0x4] sm:$0xf]
        %v325 = vld [vmem:[#allocation5 + $0x8] sm:$0xf]
        %v326 = vld [vmem:[#allocation5 + $0xc] sm:$0xf]
        %v327 = vld [vmem:[#allocation5 + $0x10] sm:$0xf]
        %v328 = vld [vmem:[#allocation5 + $0x14] sm:$0xf]
        %v329 = vld [vmem:[#allocation5 + $0x18] sm:$0xf]
        %v330 = vld [vmem:[#allocation5 + $0x1c] sm:$0xf]
        %v331 = vld [vmem:[#allocation5 + $0x20] sm:$0xf]
        %v332 = vld [vmem:[#allocation5 + $0x24] sm:$0xf]
        %v333 = vld [vmem:[#allocation5 + $0x28] sm:$0xf]
        %v334 = vld [vmem:[#allocation5 + $0x2c] sm:$0xf]
        %v335 = vld [vmem:[#allocation5 + $0x30] sm:$0xf]
        %v336 = vld [vmem:[#allocation5 + $0x34] sm:$0xf]
        %v337 = vld [vmem:[#allocation5 + $0x38] sm:$0xf]
        %v338 = vld [vmem:[#allocation5 + $0x3c] sm:$0xf]
        %v371 = vunpack.c.l.b16 %v291
        %v372 = vunpack.c.l.b16 %v292
        %v373 = vunpack.c.l.b16 %v293
        %v374 = vunpack.c.l.b16 %v294
        %v375 = vunpack.c.l.b16 %v295
        %v376 = vunpack.c.l.b16 %v296
        %v377 = vunpack.c.l.b16 %v297
        %v378 = vunpack.c.l.b16 %v298
        %v379 = vunpack.c.l.b16 %v299
        %v380 = vunpack.c.l.b16 %v300
        %v381 = vunpack.c.l.b16 %v301
        %v382 = vunpack.c.l.b16 %v302
        %v383 = vunpack.c.l.b16 %v303
        %v384 = vunpack.c.l.b16 %v304
        %v385 = vunpack.c.l.b16 %v305
        %v386 = vunpack.c.l.b16 %v306
        %v387 = vunpack.c.l.b16 %v307
        %v388 = vunpack.c.l.b16 %v308
        %v389 = vunpack.c.l.b16 %v309
        %v390 = vunpack.c.l.b16 %v310
        %v391 = vunpack.c.l.b16 %v311
        %v392 = vunpack.c.l.b16 %v312
        %v393 = vunpack.c.l.b16 %v313
        %v394 = vunpack.c.l.b16 %v314
        %v395 = vunpack.c.l.b16 %v315
        %v396 = vunpack.c.l.b16 %v316
        %v397 = vunpack.c.l.b16 %v317
        %v398 = vunpack.c.l.b16 %v318
        %v399 = vunpack.c.l.b16 %v319
        %v400 = vunpack.c.l.b16 %v320
        %v401 = vunpack.c.l.b16 %v321
        %v402 = vunpack.c.l.b16 %v322
        %v403 = vpack.c.b16 %v372, %v371
        %v404 = vpack.c.b16 %v374, %v373
        %v405 = vpack.c.b16 %v376, %v375
        %v406 = vpack.c.b16 %v378, %v377
        %v407 = vpack.c.b16 %v380, %v379
        %v408 = vpack.c.b16 %v382, %v381
        %v409 = vpack.c.b16 %v384, %v383
        %v410 = vpack.c.b16 %v386, %v385
        %v411 = vpack.c.b16 %v388, %v387
        %v412 = vpack.c.b16 %v390, %v389
        %v413 = vpack.c.b16 %v392, %v391
        %v414 = vpack.c.b16 %v394, %v393
        %v415 = vpack.c.b16 %v396, %v395
        %v416 = vpack.c.b16 %v398, %v397
        %v417 = vpack.c.b16 %v400, %v399
        %v418 = vpack.c.b16 %v402, %v401
        %v451 = vunpack.c.l.b16 %v323
        %v452 = vunpack.c.l.b16 %v324
        %v453 = vunpack.c.l.b16 %v325
        %v454 = vunpack.c.l.b16 %v326
        %v455 = vunpack.c.l.b16 %v327
        %v456 = vunpack.c.l.b16 %v328
        %v457 = vunpack.c.l.b16 %v329
        %v458 = vunpack.c.l.b16 %v330
        %v459 = vunpack.c.l.b16 %v331
        %v460 = vunpack.c.l.b16 %v332
        %v461 = vunpack.c.l.b16 %v333
        %v462 = vunpack.c.l.b16 %v334
        %v463 = vunpack.c.l.b16 %v335
        %v464 = vunpack.c.l.b16 %v336
        %v465 = vunpack.c.l.b16 %v337
        %v466 = vunpack.c.l.b16 %v338
        %v467 = vpack.c.b16 %v452, %v451
        %v468 = vpack.c.b16 %v454, %v453
        %v469 = vpack.c.b16 %v456, %v455
        %v470 = vpack.c.b16 %v458, %v457
        %v471 = vpack.c.b16 %v460, %v459
        %v472 = vpack.c.b16 %v462, %v461
        %v473 = vpack.c.b16 %v464, %v463
        %v474 = vpack.c.b16 %v466, %v465
        %483 = vmatpush.bf16.msra.mxu0 %v474
        %484 = vmatpush.bf16.msra.mxu0 %v473
        %485 = vmatpush.bf16.msra.mxu0 %v472
        %486 = vmatpush.bf16.msra.mxu0 %v471
        %487 = vmatpush.bf16.msra.mxu0 %v470
        %488 = vmatpush.bf16.msra.mxu0 %v469
        %489 = vmatpush.bf16.msra.mxu0 %v468
        %490 = vmatpush.bf16.msra.mxu0 %v467
        %491 = vmatmul.bf16.gmra.mxu0 %v403
        %v492 = vpop.f32.mrf.mxu0
        %v493 = vadd.f32 0.0, %v492
        %v494 = vpop.f32.mrf.mxu0
        %v495 = vadd.f32 0.0, %v494
        %496 = vmatmul.bf16.gmra.mxu0 %v404
        %v497 = vpop.f32.mrf.mxu0
        %v498 = vadd.f32 0.0, %v497
        %v499 = vpop.f32.mrf.mxu0
        %v500 = vadd.f32 0.0, %v499
        %501 = vmatmul.bf16.gmra.mxu0 %v405
        %v502 = vpop.f32.mrf.mxu0
        %v503 = vadd.f32 0.0, %v502
        %v504 = vpop.f32.mrf.mxu0
        %v505 = vadd.f32 0.0, %v504
        %506 = vmatmul.bf16.gmra.mxu0 %v406
        %v507 = vpop.f32.mrf.mxu0
        %v508 = vadd.f32 0.0, %v507
        %v509 = vpop.f32.mrf.mxu0
        %v510 = vadd.f32 0.0, %v509
        %511 = vmatmul.bf16.gmra.mxu0 %v407
        %v512 = vpop.f32.mrf.mxu0
        %v513 = vadd.f32 0.0, %v512
        %v514 = vpop.f32.mrf.mxu0
        %v515 = vadd.f32 0.0, %v514
        %516 = vmatmul.bf16.gmra.mxu0 %v408
        %v517 = vpop.f32.mrf.mxu0
        %v518 = vadd.f32 0.0, %v517
        %v519 = vpop.f32.mrf.mxu0
        %v520 = vadd.f32 0.0, %v519
        %521 = vmatmul.bf16.gmra.mxu0 %v409
        %v522 = vpop.f32.mrf.mxu0
        %v523 = vadd.f32 0.0, %v522
        %v524 = vpop.f32.mrf.mxu0
        %v525 = vadd.f32 0.0, %v524
        %526 = vmatmul.bf16.gmra.mxu0 %v410
        %v527 = vpop.f32.mrf.mxu0
        %v528 = vadd.f32 0.0, %v527
        %v529 = vpop.f32.mrf.mxu0
        %v530 = vadd.f32 0.0, %v529
        %531 = vmatmul.bf16.gmra.mxu0 %v411
        %v532 = vpop.f32.mrf.mxu0
        %v533 = vadd.f32 0.0, %v532
        %v534 = vpop.f32.mrf.mxu0
        %v535 = vadd.f32 0.0, %v534
        %536 = vmatmul.bf16.gmra.mxu0 %v412
        %v537 = vpop.f32.mrf.mxu0
        %v538 = vadd.f32 0.0, %v537
        %v539 = vpop.f32.mrf.mxu0
        %v540 = vadd.f32 0.0, %v539
        %541 = vmatmul.bf16.gmra.mxu0 %v413
        %v542 = vpop.f32.mrf.mxu0
        %v543 = vadd.f32 0.0, %v542
        %v544 = vpop.f32.mrf.mxu0
        %v545 = vadd.f32 0.0, %v544
        %546 = vmatmul.bf16.gmra.mxu0 %v414
        %v547 = vpop.f32.mrf.mxu0
        %v548 = vadd.f32 0.0, %v547
        %v549 = vpop.f32.mrf.mxu0
        %v550 = vadd.f32 0.0, %v549
        %551 = vmatmul.bf16.gmra.mxu0 %v415
        %v552 = vpop.f32.mrf.mxu0
        %v553 = vadd.f32 0.0, %v552
        %v554 = vpop.f32.mrf.mxu0
        %v555 = vadd.f32 0.0, %v554
        %556 = vmatmul.bf16.gmra.mxu0 %v416
        %v557 = vpop.f32.mrf.mxu0
        %v558 = vadd.f32 0.0, %v557
        %v559 = vpop.f32.mrf.mxu0
        %v560 = vadd.f32 0.0, %v559
        %561 = vmatmul.bf16.gmra.mxu0 %v417
        %v562 = vpop.f32.mrf.mxu0
        %v563 = vadd.f32 0.0, %v562
        %v564 = vpop.f32.mrf.mxu0
        %v565 = vadd.f32 0.0, %v564
        %566 = vmatmul.bf16.gmra.mxu0 %v418
        %v567 = vpop.f32.mrf.mxu0
        %v568 = vadd.f32 0.0, %v567
        %v569 = vpop.f32.mrf.mxu0
        %v570 = vadd.f32 0.0, %v569
        %571 = vdwg.mxu0
        %v572 = vld [vmem:[%s2] sm:$0x1]
        %v573 = vld [vmem:[%s5] sm:$0x1]
        %v574 = vadd.f32 %v573, 1e-05
        %v575 = vrsqrt.pop %v574
        %v576 = vmul.f32 %v575, %v574
        %v577 = vmul.f32 %v576, %v575
        %v578 = vmul.f32 0.5, %v577
        %v579 = vsub.f32 1.5, %v578
        %v580 = vmul.f32 %v575, %v579
        %vm581 = vweird.f32 %v574
        %vm582 = vweird.f32 %v575
        %vm583 = vmor %vm581, %vm582
        %v584 = vsel %vm583, %v575, %v580
        %v585 = vmul.f32 %v572, %v584
        %v586 = vld [vmem:[%s3] sm:$0x1]
        %v587 = vld [vmem:[%s4] sm:$0x1]
        %v588 = vmul.f32 %v587, %v585
        %v589 = vsub.f32 %v586, %v588
        %v591 = vperm.slane %v585, 0
        %v593 = vmul.f32 %v493, %v591
        %v594 = vmul.f32 %v495, %v591
        %v595 = vmul.f32 %v498, %v591
        %v596 = vmul.f32 %v500, %v591
        %v597 = vmul.f32 %v503, %v591
        %v598 = vmul.f32 %v505, %v591
        %v599 = vmul.f32 %v508, %v591
        %v600 = vmul.f32 %v510, %v591
        %v601 = vmul.f32 %v513, %v591
        %v602 = vmul.f32 %v515, %v591
        %v603 = vmul.f32 %v518, %v591
        %v604 = vmul.f32 %v520, %v591
        %v605 = vmul.f32 %v523, %v591
        %v606 = vmul.f32 %v525, %v591
        %v607 = vmul.f32 %v528, %v591
        %v608 = vmul.f32 %v530, %v591
        %v609 = vmul.f32 %v533, %v591
        %v610 = vmul.f32 %v535, %v591
        %v611 = vmul.f32 %v538, %v591
        %v612 = vmul.f32 %v540, %v591
        %v613 = vmul.f32 %v543, %v591
        %v614 = vmul.f32 %v545, %v591
        %v615 = vmul.f32 %v548, %v591
        %v616 = vmul.f32 %v550, %v591
        %v617 = vmul.f32 %v553, %v591
        %v618 = vmul.f32 %v555, %v591
        %v619 = vmul.f32 %v558, %v591
        %v620 = vmul.f32 %v560, %v591
        %v621 = vmul.f32 %v563, %v591
        %v622 = vmul.f32 %v565, %v591
        %v623 = vmul.f32 %v568, %v591
        %v624 = vmul.f32 %v570, %v591
        %v626 = vperm.slane %v589, 0
        %v628 = vadd.f32 %v593, %v626
        %v629 = vadd.f32 %v594, %v626
        %v630 = vadd.f32 %v595, %v626
        %v631 = vadd.f32 %v596, %v626
        %v632 = vadd.f32 %v597, %v626
        %v633 = vadd.f32 %v598, %v626
        %v634 = vadd.f32 %v599, %v626
        %v635 = vadd.f32 %v600, %v626
        %v636 = vadd.f32 %v601, %v626
        %v637 = vadd.f32 %v602, %v626
        %v638 = vadd.f32 %v603, %v626
        %v639 = vadd.f32 %v604, %v626
        %v640 = vadd.f32 %v605, %v626
        %v641 = vadd.f32 %v606, %v626
        %v642 = vadd.f32 %v607, %v626
        %v643 = vadd.f32 %v608, %v626
        %v644 = vadd.f32 %v609, %v626
        %v645 = vadd.f32 %v610, %v626
        %v646 = vadd.f32 %v611, %v626
        %v647 = vadd.f32 %v612, %v626
        %v648 = vadd.f32 %v613, %v626
        %v649 = vadd.f32 %v614, %v626
        %v650 = vadd.f32 %v615, %v626
        %v651 = vadd.f32 %v616, %v626
        %v652 = vadd.f32 %v617, %v626
        %v653 = vadd.f32 %v618, %v626
        %v654 = vadd.f32 %v619, %v626
        %v655 = vadd.f32 %v620, %v626
        %v656 = vadd.f32 %v621, %v626
        %v657 = vadd.f32 %v622, %v626
        %v658 = vadd.f32 %v623, %v626
        %v659 = vadd.f32 %v624, %v626
        %v660 = vmax.f32 %v628, 0.0
        %v661 = vmax.f32 %v629, 0.0
        %v662 = vmax.f32 %v630, 0.0
        %v663 = vmax.f32 %v631, 0.0
        %v664 = vmax.f32 %v632, 0.0
        %v665 = vmax.f32 %v633, 0.0
        %v666 = vmax.f32 %v634, 0.0
        %v667 = vmax.f32 %v635, 0.0
        %v668 = vmax.f32 %v636, 0.0
        %v669 = vmax.f32 %v637, 0.0
        %v670 = vmax.f32 %v638, 0.0
        %v671 = vmax.f32 %v639, 0.0
        %v672 = vmax.f32 %v640, 0.0
        %v673 = vmax.f32 %v641, 0.0
        %v674 = vmax.f32 %v642, 0.0
        %v675 = vmax.f32 %v643, 0.0
        %v676 = vmax.f32 %v644, 0.0
        %v677 = vmax.f32 %v645, 0.0
        %v678 = vmax.f32 %v646, 0.0
        %v679 = vmax.f32 %v647, 0.0
        %v680 = vmax.f32 %v648, 0.0
        %v681 = vmax.f32 %v649, 0.0
        %v682 = vmax.f32 %v650, 0.0
        %v683 = vmax.f32 %v651, 0.0
        %v684 = vmax.f32 %v652, 0.0
        %v685 = vmax.f32 %v653, 0.0
        %v686 = vmax.f32 %v654, 0.0
        %v687 = vmax.f32 %v655, 0.0
        %v688 = vmax.f32 %v656, 0.0
        %v689 = vmax.f32 %v657, 0.0
        %v690 = vmax.f32 %v658, 0.0
        %v691 = vmax.f32 %v659, 0.0
        %692 = vst [vmem:[%s288] sm:$0xff] %v660
        %693 = vst [vmem:[%s288 + $0x8] sm:$0xff] %v661
        %694 = vst [vmem:[%s288 + $0x10] sm:$0xff] %v662
        %695 = vst [vmem:[%s288 + $0x18] sm:$0xff] %v663
        %696 = vst [vmem:[%s288 + $0x20] sm:$0xff] %v664
        %697 = vst [vmem:[%s288 + $0x28] sm:$0xff] %v665
        %698 = vst [vmem:[%s288 + $0x30] sm:$0xff] %v666
        %699 = vst [vmem:[%s288 + $0x38] sm:$0xff] %v667
        %700 = vst [vmem:[%s288 + $0x40] sm:$0xff] %v668
        %701 = vst [vmem:[%s288 + $0x48] sm:$0xff] %v669
        %702 = vst [vmem:[%s288 + $0x50] sm:$0xff] %v670
        %703 = vst [vmem:[%s288 + $0x58] sm:$0xff] %v671
        %704 = vst [vmem:[%s288 + $0x60] sm:$0xff] %v672
        %705 = vst [vmem:[%s288 + $0x68] sm:$0xff] %v673
        %706 = vst [vmem:[%s288 + $0x70] sm:$0xff] %v674
        %707 = vst [vmem:[%s288 + $0x78] sm:$0xff] %v675
        %708 = vst [vmem:[%s288 + $0x80] sm:$0xff] %v676
        %709 = vst [vmem:[%s288 + $0x88] sm:$0xff] %v677
        %710 = vst [vmem:[%s288 + $0x90] sm:$0xff] %v678
        %711 = vst [vmem:[%s288 + $0x98] sm:$0xff] %v679
        %712 = vst [vmem:[%s288 + $0xa0] sm:$0xff] %v680
        %713 = vst [vmem:[%s288 + $0xa8] sm:$0xff] %v681
        %714 = vst [vmem:[%s288 + $0xb0] sm:$0xff] %v682
        %715 = vst [vmem:[%s288 + $0xb8] sm:$0xff] %v683
        %716 = vst [vmem:[%s288 + $0xc0] sm:$0xff] %v684
        %717 = vst [vmem:[%s288 + $0xc8] sm:$0xff] %v685
        %718 = vst [vmem:[%s288 + $0xd0] sm:$0xff] %v686
        %719 = vst [vmem:[%s288 + $0xd8] sm:$0xff] %v687
        %720 = vst [vmem:[%s288 + $0xe0] sm:$0xff] %v688
        %721 = vst [vmem:[%s288 + $0xe8] sm:$0xff] %v689
        %722 = vst [vmem:[%s288 + $0xf0] sm:$0xff] %v690
        %723 = vst [vmem:[%s288 + $0xf8] sm:$0xff] %v691
        %s724 = sand.u32 %s163, 1
        %s725 = scalar_lea.sflag [#allocation4], %s724
        %s726 = sand.u32 %s163, 1
        %s727 = smul.addr %s726, 256
        %s728 = scalar_lea.vmem [#allocation7], %s727
        // Predicated region
        $region53: #{tpu_custom_call.1} parent=43 // pred_check
          %p729 = pneg %p173
        $region54: #{tpu_custom_call.1} parent=43 // pred_check_branch
          %731 = sbr.rel (%p729) target = $region56
        $region55: #{tpu_custom_call.1} parent=43 // pred_region
          %s732 = smul.u32 32, %s24
          %734 = vsyncadd %s725, 0
          %s735 = smul.addr %s732, 8
          %s736 = scalar_lea.hbm %s6, %s735
          %s737 = sshll.u32 %s728, 4
          %s738 = int_to_ptr.vmem [resolvable:$true] %s737
          %s739 = sshll.u32 %s736, 4
          %s740 = int_to_ptr.hbm [resolvable:$true] %s739
          %745 = dma.vmem_to_hbm [thread:$0]  %s738, 4096, %s740, %s725, 128, 128, 8
        $region56: #{tpu_custom_call.1} parent=43 // pred_fallthru
          _
      $region44: #{tpu_custom_call.1} parent=5 // pred_fallthru
        _
      %p746 = scmp.le.s32.totalorder 2, %s19
      // Predicated region
      $region57: #{tpu_custom_call.1} parent=5 // pred_check
        %p747 = pneg %p746
      $region58: #{tpu_custom_call.1} parent=5 // pred_check_branch
        %749 = sbr.rel (%p747) target = $region60
      $region59: #{tpu_custom_call.1} parent=5 // pred_region
        %s750 = ssub.s32 %s19, 2
        // Predicated region
        $region61: #{tpu_custom_call.1} parent=59 // pred_check
          %p751 = pneg %p179
        $region62: #{tpu_custom_call.1} parent=59 // pred_check_branch
          %753 = sbr.rel (%p751) target = $region64
        $region63: #{tpu_custom_call.1} parent=59 // pred_region
          %s754 = sand.u32 %s164, 1
          %s755 = scalar_lea.sflag [#allocation4], %s754
          %s756 = sand.u32 %s164, 1
          %s757 = smul.addr %s756, 256
          %s758 = scalar_lea.vmem [#allocation7], %s757
          %760 = dma.done %s755, 4096
        $region64: #{tpu_custom_call.1} parent=59 // pred_fallthru
          _
      $region60: #{tpu_custom_call.1} parent=5 // pred_fallthru
        _
    $region6: #{tpu_custom_call.1} parent=1 // loop_footer
      %s23 = sadd.s32 1, %s19
    $region7: #{tpu_custom_call.1} parent=1 // loop_footer_branch
      %18 = sbr.rel target = $region3
    $region8: #{tpu_custom_call.1} parent=1 // loop_exit
      _
    %761 = vsyncpa [#allocation3], 1
    %s762 = scalar_lea.sflag [#allocation3], 1
    %763 = vsyncpa %s762, 1
    %764 = vsyncpa [#allocation6], 1
    %765 = vsyncpa [#allocation4], 1
    %s766 = scalar_lea.sflag [#allocation4], 1
    %767 = vsyncpa %s766, 1

</llo_original>
